<compile_context>
chip_gen: v7x
topology: tpu7x:2x2x1
jax: 0.10.0
libtpu: 0.0.40
codegen_flags: <defaults>
</compile_context>

<pallas_src>
import jax
import jax.numpy as jnp
from jax.experimental import pallas as pl
from jax.experimental.pallas import tpu as pltpu

_LANE = 128
_SUBLANE = 8
# (2, 2048, 128) f32 block = 2 MiB; 1 input + 1 output, double-buffered -> 8 MiB.
_MAX_TILE_ROWS = 2048


def _round_up(x: int, m: int) -> int:
    return ((x + m - 1) // m) * m


def _phase_relu_kernel(x_ref, o_ref):
    # x_ref / o_ref: (2, tile_rows, 128) f32 blocks; plane 0 = real, plane 1 = imag.
    re = x_ref[0]
    im = x_ref[1]
    # |z| (activation-scale data; no hypot-style rescaling needed).
    mag = jnp.sqrt(re * re + im * im)
    # angle(z) < 0  <=>  sign bit of imag is set (also catches imag == -0.0,
    # matching atan2 / the PyTorch reference).  ReLU on the phase then clamps
    # z to (|z|, 0); otherwise z is unchanged.
    neg_phase = pltpu.bitcast(im, jnp.int32) < 0
    o_ref[0] = jnp.where(neg_phase, mag, re)
    o_ref[1] = jnp.maximum(im, 0.0)  # im if phase kept, 0 if phase clamped


def _phase_relu_planar_impl(planar: jax.Array) -> jax.Array:
    """PhaseReLU on a planar (2, ...) float array: [0] = real plane, [1] = imag plane."""
    assert planar.shape[0] == 2 and jnp.issubdtype(planar.dtype, jnp.floating)
    fdtype = planar.dtype
    spatial = planar.shape[1:]
    n = 1
    for d in spatial:
        n *= d

    # Lane-dense slab; pad only a ragged remainder (reshapes are free otherwise).
    tile_elems = _LANE * _SUBLANE
    n_pad = _round_up(max(n, tile_elems), tile_elems)
    pad = n_pad - n
    rows = n_pad // _LANE  # multiple of 8 by construction

    flat = planar.reshape(2, n)
    if pad:
        flat = jnp.pad(flat, ((0, 0), (0, pad)))
    slab = flat.reshape(2, rows, _LANE)

    # Ensure >= 2 grid blocks whenever possible so both v7x TensorCores get work
    # (harmless extra step on 1-TC v5e/v6e); cap block size for VMEM / overhead.
    min_blocks = 2 if rows >= 2 * _SUBLANE else 1
    n_blocks = max(min_blocks, pl.cdiv(rows, _MAX_TILE_ROWS))
    tile_rows = _round_up(pl.cdiv(rows, n_blocks), _SUBLANE)
    grid = (pl.cdiv(rows, tile_rows),)  # ragged last block is masked by Pallas

    spec = pl.BlockSpec((2, tile_rows, _LANE), lambda i: (0, i, 0))

    # Note: no input_output_aliases — when this planar entry point is called with a
    # non-donated argument, XLA's copy-insertion would add a full extra pass that
    # outweighs the footprint saving.
    out = pl.pallas_call(
        _phase_relu_kernel,
        out_shape=jax.ShapeDtypeStruct((2, rows, _LANE), fdtype),
        grid_spec=pltpu.PrefetchScalarGridSpec(
            num_scalar_prefetch=0,
            grid=grid,
            in_specs=[spec],
            out_specs=spec,
        ),
        compiler_params=pltpu.CompilerParams(
            dimension_semantics=("parallel",),
        ),
    )(slab)

    out_flat = out.reshape(2, n_pad)
    if pad:
        out_flat = out_flat[:, :n]
    return out_flat.reshape((2,) + spatial)


def _phase_relu_complex_impl(x: jax.Array) -> jax.Array:
    """Module-spec interface: complex in, complex out."""
    assert jnp.issubdtype(x.dtype, jnp.complexfloating)
    # Complex I/O forces planar<->interleaved conversion passes around the kernel
    # (complex dtypes can't enter Pallas refs); keep the surrounding model planar
    # and call phase_relu_planar directly to avoid them.
    planar = jnp.stack([jnp.real(x), jnp.imag(x)])  # single fused read of x
    out = _phase_relu_planar_impl(planar)
    return jax.lax.complex(out[0], out[1])


phase_relu = jax.jit(_phase_relu_complex_impl)
phase_relu_planar = jax.jit(_phase_relu_planar_impl)


if __name__ == "__main__":
    key = jax.random.PRNGKey(0)
    k1, k2 = jax.random.split(key)
    shape = (2, 4, 16, 16)  # NCHW, matching the PyTorch convention
    real = jax.random.normal(k1, shape, dtype=jnp.float32)
    imag = jax.random.normal(k2, shape, dtype=jnp.float32)
    x = jax.lax.complex(real, imag)  # complex64

    out = jax.block_until_ready(phase_relu(x))

    # Reference: literal translation of the PyTorch forward.
    angle = jnp.angle(x)
    relu_angle = jnp.maximum(angle, 0.0)
    ref = jnp.abs(x) * (jnp.cos(relu_angle) + 1j * jnp.sin(relu_angle))

    assert out.shape == shape and out.dtype == x.dtype
    assert jnp.allclose(out, ref, atol=1e-4, rtol=1e-4), "mismatch vs reference"

    # Planar fast path (no complex<->planar conversion passes) must agree too.
    out_planar = jax.block_until_ready(phase_relu_planar(jnp.stack([real, imag])))
    assert out_planar.shape == (2,) + shape
    assert jnp.allclose(out_planar[0], jnp.real(ref), atol=1e-4, rtol=1e-4)
    assert jnp.allclose(out_planar[1], jnp.imag(ref), atol=1e-4, rtol=1e-4)

    print("KERNEL_OK")
</pallas_src>

<mosaic_0001>
module attributes {stable_mosaic.version = 11 : i64} {
  func.func @_phase_relu_kernel(%arg0: i32, %arg1: memref<2x8x128xf32, #tpu.memory_space<vmem>>, %arg2: memref<2x8x128xf32, #tpu.memory_space<vmem>>) attributes {dimension_semantics = [#tpu.dimension_semantics<parallel>], iteration_bounds = array<i64: 2>, scalar_prefetch = 0 : i64, scratch_operands = 0 : i64, tpu.core_type = #tpu.core_type<tc>, window_params = [{transform_indices = @transform_0, window_bounds = array<i64: 2, 8, 128>}, {transform_indices = @transform_1, window_bounds = array<i64: 2, 8, 128>}]} {
    %c0 = arith.constant 0 : index
    %c0_0 = arith.constant 0 : index
    %c0_1 = arith.constant 0 : index
    %0 = vector.load %arg1[%c0, %c0_0, %c0_1] : memref<2x8x128xf32, #tpu.memory_space<vmem>>, vector<1x8x128xf32>
    %1 = vector.shape_cast %0 : vector<1x8x128xf32> to vector<8x128xf32>
    %c1 = arith.constant 1 : index
    %c0_2 = arith.constant 0 : index
    %c0_3 = arith.constant 0 : index
    %2 = vector.load %arg1[%c1, %c0_2, %c0_3] : memref<2x8x128xf32, #tpu.memory_space<vmem>>, vector<1x8x128xf32>
    %3 = vector.shape_cast %2 : vector<1x8x128xf32> to vector<8x128xf32>
    %4 = arith.mulf %1, %1 : vector<8x128xf32>
    %5 = arith.mulf %3, %3 : vector<8x128xf32>
    %6 = arith.addf %4, %5 : vector<8x128xf32>
    %7 = math.sqrt %6 : vector<8x128xf32>
    %8 = tpu.bitcast %3 : vector<8x128xf32> -> vector<8x128xi32>
    %c0_i32 = arith.constant 0 : i32
    %9 = vector.broadcast %c0_i32 : i32 to vector<8x128xi32>
    %10 = arith.cmpi slt, %8, %9 : vector<8x128xi32>
    %11 = arith.select %10, %7, %1 : vector<8x128xi1>, vector<8x128xf32>
    %c0_4 = arith.constant 0 : index
    %c0_5 = arith.constant 0 : index
    %c0_6 = arith.constant 0 : index
    %12 = vector.load %arg2[%c0_4, %c0_5, %c0_6] : memref<2x8x128xf32, #tpu.memory_space<vmem>>, vector<1x8x128xf32>
    %13 = vector.shape_cast %12 : vector<1x8x128xf32> to vector<8x128xf32>
    %14 = vector.shape_cast %11 : vector<8x128xf32> to vector<1x8x128xf32>
    tpu.vector_store %arg2[%c0_4, %c0_5, %c0_6], %14 {strides = array<i32>} : memref<2x8x128xf32, #tpu.memory_space<vmem>>, vector<1x8x128xf32>,
    %cst = arith.constant 0.000000e+00 : f32
    %15 = vector.broadcast %cst : f32 to vector<8x128xf32>
    %16 = arith.maximumf %3, %15 : vector<8x128xf32>
    %c1_7 = arith.constant 1 : index
    %c0_8 = arith.constant 0 : index
    %c0_9 = arith.constant 0 : index
    %17 = vector.load %arg2[%c1_7, %c0_8, %c0_9] : memref<2x8x128xf32, #tpu.memory_space<vmem>>, vector<1x8x128xf32>
    %18 = vector.shape_cast %17 : vector<1x8x128xf32> to vector<8x128xf32>
    %19 = vector.shape_cast %16 : vector<8x128xf32> to vector<1x8x128xf32>
    tpu.vector_store %arg2[%c1_7, %c0_8, %c0_9], %19 {strides = array<i32>} : memref<2x8x128xf32, #tpu.memory_space<vmem>>, vector<1x8x128xf32>,
    return
  }
  func.func @transform_0(%arg0: i32) -> (i32, i32, i32) {
    %c0_i32 = arith.constant 0 : i32
    %c0_i32_0 = arith.constant 0 : i32
    %c0_i32_1 = arith.constant 0 : i32
    return %c0_i32, %arg0, %c0_i32_0 : i32, i32, i32
  }
  func.func @transform_1(%arg0: i32) -> (i32, i32, i32) {
    %c0_i32 = arith.constant 0 : i32
    %c0_i32_0 = arith.constant 0 : i32
    %c0_i32_1 = arith.constant 0 : i32
    return %c0_i32, %arg0, %c0_i32_0 : i32, i32, i32
  }
}

</mosaic_0001>

<llo_original>
// kernel: custom-call
$region0: #{custom-call}
  %s0 = inlined_call_operand.hbm [shape: c64[2,4,16,16], index: 0, kind: input, shape index: {}]
  %s1 = inlined_call_operand.vmem [shape: f32[2,4,16,16], index: 1, kind: output, shape index: {}]
  $region1: #{custom-call} parent=0
    #allocation0 [shape = 's32[1]{0}', space=sflag, size = 0x4, scoped, tag = 'scoped memory for custom-call']
    %2 = vsyncpa [#allocation0], 0
    %s3 = sshll.u32 %s1, 4
    %s4 = int_to_ptr.vmem [resolvable:$true] %s3
    %6 = dma.hbm_to_vmem [thread:$0]  %s0, 2048, %s4, [#allocation0]
    %7 = dma.done [#allocation0], 2048
    %8 = vsyncpa [#allocation0], 1

// kernel: custom-call.1
$region0: #{custom-call.1}
  %s0 = inlined_call_operand.hbm [shape: c64[2,4,16,16], index: 0, kind: input, shape index: {}]
  %s1 = inlined_call_operand.vmem [shape: f32[2,4,16,16], index: 1, kind: output, shape index: {}]
  %s2 = scalar_lea.hbm %s0, 2048
  $region1: #{custom-call.1} parent=0
    #allocation0 [shape = 's32[1]{0}', space=sflag, size = 0x4, scoped, tag = 'scoped memory for custom-call.1']
    %3 = vsyncpa [#allocation0], 0
    %s4 = sshll.u32 %s1, 4
    %s5 = int_to_ptr.vmem [resolvable:$true] %s4
    %7 = dma.hbm_to_vmem [thread:$0]  %s2, 2048, %s5, [#allocation0]
    %8 = dma.done [#allocation0], 2048
    %9 = vsyncpa [#allocation0], 1

// kernel: squeeze.2
$region0: #{squeeze.2}
  %s0 = inlined_call_operand.vmem [shape: f32[1,16,128], index: 0, kind: input, shape index: {}]
  %s1 = inlined_call_operand.vmem [shape: f32[2,4,16,16], index: 1, kind: output, shape index: {}]
  %v2 = vld [vmem:[%s0] sm:$0xff]
  %vm3 = vcmask 130048
  %4 = vst.msk [vmem:[%s1] ss:$8 sm:$0xf] %vm3, %v2
  %5 = vst.msk [vmem:[%s1] ss:$8 sm:$0xf0] %vm3, %v2
  %s6 = scalar_lea.vmem %s0, 8
  %v7 = vld [vmem:[%s6] sm:$0xff]
  %vm8 = vcmask 130048
  %s9 = scalar_lea.vmem %s1, 64
  %10 = vst.msk [vmem:[%s9] ss:$8 sm:$0xf] %vm8, %v7
  %s11 = scalar_lea.vmem %s1, 64
  %12 = vst.msk [vmem:[%s11] ss:$8 sm:$0xf0] %vm8, %v7
  %v13 = vld [vmem:[%s0] sm:$0xff]
  %14 = vrot.lane.b32.xlu0 %v13, 112
  %v15 = vpop.permute.xlu0 %14
  %vm16 = vcmask 130048
  %s17 = scalar_lea.vmem %s1, 1
  %18 = vst.msk [vmem:[%s17] ss:$8 sm:$0xf] %vm16, %v15
  %s19 = scalar_lea.vmem %s1, 1
  %20 = vst.msk [vmem:[%s19] ss:$8 sm:$0xf0] %vm16, %v15
  %s21 = scalar_lea.vmem %s0, 8
  %v22 = vld [vmem:[%s21] sm:$0xff]
  %23 = vrot.lane.b32.xlu0 %v22, 112
  %v24 = vpop.permute.xlu0 %23
  %vm25 = vcmask 130048
  %s26 = scalar_lea.vmem %s1, 65
  %27 = vst.msk [vmem:[%s26] ss:$8 sm:$0xf] %vm25, %v24
  %s28 = scalar_lea.vmem %s1, 65
  %29 = vst.msk [vmem:[%s28] ss:$8 sm:$0xf0] %vm25, %v24
  %v30 = vld [vmem:[%s0] sm:$0xff]
  %31 = vrot.lane.b32.xlu0 %v30, 96
  %v32 = vpop.permute.xlu0 %31
  %vm33 = vcmask 130048
  %s34 = scalar_lea.vmem %s1, 2
  %35 = vst.msk [vmem:[%s34] ss:$8 sm:$0xf] %vm33, %v32
  %s36 = scalar_lea.vmem %s1, 2
  %37 = vst.msk [vmem:[%s36] ss:$8 sm:$0xf0] %vm33, %v32
  %s38 = scalar_lea.vmem %s0, 8
  %v39 = vld [vmem:[%s38] sm:$0xff]
  %40 = vrot.lane.b32.xlu0 %v39, 96
  %v41 = vpop.permute.xlu0 %40
  %vm42 = vcmask 130048
  %s43 = scalar_lea.vmem %s1, 66
  %44 = vst.msk [vmem:[%s43] ss:$8 sm:$0xf] %vm42, %v41
  %s45 = scalar_lea.vmem %s1, 66
  %46 = vst.msk [vmem:[%s45] ss:$8 sm:$0xf0] %vm42, %v41
  %v47 = vld [vmem:[%s0] sm:$0xff]
  %48 = vrot.lane.b32.xlu0 %v47, 80
  %v49 = vpop.permute.xlu0 %48
  %vm50 = vcmask 130048
  %s51 = scalar_lea.vmem %s1, 3
  %52 = vst.msk [vmem:[%s51] ss:$8 sm:$0xf] %vm50, %v49
  %s53 = scalar_lea.vmem %s1, 3
  %54 = vst.msk [vmem:[%s53] ss:$8 sm:$0xf0] %vm50, %v49
  %s55 = scalar_lea.vmem %s0, 8
  %v56 = vld [vmem:[%s55] sm:$0xff]
  %57 = vrot.lane.b32.xlu0 %v56, 80
  %v58 = vpop.permute.xlu0 %57
  %vm59 = vcmask 130048
  %s60 = scalar_lea.vmem %s1, 67
  %61 = vst.msk [vmem:[%s60] ss:$8 sm:$0xf] %vm59, %v58
  %s62 = scalar_lea.vmem %s1, 67
  %63 = vst.msk [vmem:[%s62] ss:$8 sm:$0xf0] %vm59, %v58
  %v64 = vld [vmem:[%s0] sm:$0xff]
  %65 = vrot.lane.b32.xlu0 %v64, 64
  %v66 = vpop.permute.xlu0 %65
  %vm67 = vcmask 130048
  %s68 = scalar_lea.vmem %s1, 4
  %69 = vst.msk [vmem:[%s68] ss:$8 sm:$0xf] %vm67, %v66
  %s70 = scalar_lea.vmem %s1, 4
  %71 = vst.msk [vmem:[%s70] ss:$8 sm:$0xf0] %vm67, %v66
  %s72 = scalar_lea.vmem %s0, 8
  %v73 = vld [vmem:[%s72] sm:$0xff]
  %74 = vrot.lane.b32.xlu0 %v73, 64
  %v75 = vpop.permute.xlu0 %74
  %vm76 = vcmask 130048
  %s77 = scalar_lea.vmem %s1, 68
  %78 = vst.msk [vmem:[%s77] ss:$8 sm:$0xf] %vm76, %v75
  %s79 = scalar_lea.vmem %s1, 68
  %80 = vst.msk [vmem:[%s79] ss:$8 sm:$0xf0] %vm76, %v75
  %v81 = vld [vmem:[%s0] sm:$0xff]
  %82 = vrot.lane.b32.xlu0 %v81, 48
  %v83 = vpop.permute.xlu0 %82
  %vm84 = vcmask 130048
  %s85 = scalar_lea.vmem %s1, 5
  %86 = vst.msk [vmem:[%s85] ss:$8 sm:$0xf] %vm84, %v83
  %s87 = scalar_lea.vmem %s1, 5
  %88 = vst.msk [vmem:[%s87] ss:$8 sm:$0xf0] %vm84, %v83
  %s89 = scalar_lea.vmem %s0, 8
  %v90 = vld [vmem:[%s89] sm:$0xff]
  %91 = vrot.lane.b32.xlu0 %v90, 48
  %v92 = vpop.permute.xlu0 %91
  %vm93 = vcmask 130048
  %s94 = scalar_lea.vmem %s1, 69
  %95 = vst.msk [vmem:[%s94] ss:$8 sm:$0xf] %vm93, %v92
  %s96 = scalar_lea.vmem %s1, 69
  %97 = vst.msk [vmem:[%s96] ss:$8 sm:$0xf0] %vm93, %v92
  %v98 = vld [vmem:[%s0] sm:$0xff]
  %99 = vrot.lane.b32.xlu0 %v98, 32
  %v100 = vpop.permute.xlu0 %99
  %vm101 = vcmask 130048
  %s102 = scalar_lea.vmem %s1, 6
  %103 = vst.msk [vmem:[%s102] ss:$8 sm:$0xf] %vm101, %v100
  %s104 = scalar_lea.vmem %s1, 6
  %105 = vst.msk [vmem:[%s104] ss:$8 sm:$0xf0] %vm101, %v100
  %s106 = scalar_lea.vmem %s0, 8
  %v107 = vld [vmem:[%s106] sm:$0xff]
  %108 = vrot.lane.b32.xlu0 %v107, 32
  %v109 = vpop.permute.xlu0 %108
  %vm110 = vcmask 130048
  %s111 = scalar_lea.vmem %s1, 70
  %112 = vst.msk [vmem:[%s111] ss:$8 sm:$0xf] %vm110, %v109
  %s113 = scalar_lea.vmem %s1, 70
  %114 = vst.msk [vmem:[%s113] ss:$8 sm:$0xf0] %vm110, %v109
  %v115 = vld [vmem:[%s0] sm:$0xff]
  %116 = vrot.lane.b32.xlu0 %v115, 16
  %v117 = vpop.permute.xlu0 %116
  %vm118 = vcmask 130048
  %s119 = scalar_lea.vmem %s1, 7
  %120 = vst.msk [vmem:[%s119] ss:$8 sm:$0xf] %vm118, %v117
  %s121 = scalar_lea.vmem %s1, 7
  %122 = vst.msk [vmem:[%s121] ss:$8 sm:$0xf0] %vm118, %v117
  %s123 = scalar_lea.vmem %s0, 8
  %v124 = vld [vmem:[%s123] sm:$0xff]
  %125 = vrot.lane.b32.xlu0 %v124, 16
  %v126 = vpop.permute.xlu0 %125
  %vm127 = vcmask 130048
  %s128 = scalar_lea.vmem %s1, 71
  %129 = vst.msk [vmem:[%s128] ss:$8 sm:$0xf] %vm127, %v126
  %s130 = scalar_lea.vmem %s1, 71
  %131 = vst.msk [vmem:[%s130] ss:$8 sm:$0xf0] %vm127, %v126

// kernel: custom-call.2
$region0: #{custom-call.2}
  %s0 = inlined_call_operand.vmem [shape: f32[2,4,16,16], index: 0, kind: input, shape index: {}]
  %s1 = inlined_call_operand.vmem [shape: f32[2,4,16,16], index: 1, kind: input, shape index: {}]
  %s2 = inlined_call_operand.hbm [shape: c64[2,4,16,16], index: 2, kind: output, shape index: {}]
  %s3 = scalar_lea.hbm %s2, 2048
  $region1: #{custom-call.2} parent=0
    #allocation0 [shape = 's32[1]{0}', space=sflag, size = 0x4, scoped, tag = 'scoped memory for custom-call.2']
    %4 = vsyncpa [#allocation0], 0
    %s5 = sshll.u32 %s0, 4
    %s6 = int_to_ptr.vmem [resolvable:$true] %s5
    %8 = dma.vmem_to_hbm [thread:$0]  %s6, 2048, %s2, [#allocation0]
    %9 = dma.done [#allocation0], 2048
    %10 = vsyncpa [#allocation0], 1
  $region2: #{custom-call.2} parent=0
    #allocation1 [shape = 's32[1]{0}', space=sflag, size = 0x4, scoped, tag = 'scoped memory for custom-call.2']
    %11 = vsyncpa [#allocation1], 0
    %s12 = sshll.u32 %s1, 4
    %s13 = int_to_ptr.vmem [resolvable:$true] %s12
    %15 = dma.vmem_to_hbm [thread:$0]  %s13, 2048, %s3, [#allocation1]
    %16 = dma.done [#allocation1], 2048
    %17 = vsyncpa [#allocation1], 1

// kernel: _phase_relu_complex_impl.1
$region0: #{_phase_relu_complex_impl.1}
  #allocation0 [shape = 'u32[]', space=smem, size = 0x4, offset = 0x4, fixed_abs, tag = 'smem constant byte address 0x4 - core index']
  #allocation1 [shape = 'u32[144,128]{1,0:T(1,128)}', space=vmem, size = 0x12000, scoped, tag = 'internal scratch']
  %s0 = inlined_call_operand.vmem [shape: f32[2,16,128], index: 0, kind: input, shape index: {}]
  %s1 = inlined_call_operand.vmem [shape: f32[2,16,128], index: 1, kind: output, shape index: {}]
  %s2 = sld [smem:[#allocation0]]
  $region109: #{_phase_relu_complex_impl.1} parent=0
    _
  %s4 = ssub.s32 1, %s2
  %s5 = scalar_select 0, %s4, %s2
  $region1: #{_phase_relu_complex_impl.1} parent=0
    #allocation2 [shape = 'u8[16384]{0}', space=vmem, size = 0x4000, scoped, tag = 'input window, operand 0']
    #allocation3 [shape = 'u8[16384]{0}', space=vmem, size = 0x4000, scoped, tag = 'output window, operand 0']
    loop: start=0, step=1, limit=4
    $region2: #{_phase_relu_complex_impl.1} parent=1 // loop_pre_header
      _
    $region3: #{_phase_relu_complex_impl.1} parent=1 // loop_header
      %s7 = sphi 0, %s11
      %p8 = scmp.ge.s32.totalorder %s7, 4
      %s17 = sphi 0, %s19
      %s20 = sphi 0, %s17
      %s21 = sphi 0, %s20
      %s37 = sphi 0, %s21
      %s43 = sphi 0, %s45
      %s46 = sphi 0, %s43
      %s47 = sphi 0, %s46
      %s63 = sphi 0, %s47
    $region4: #{_phase_relu_complex_impl.1} parent=1 // loop_header_branch
      %10 = sbr.rel (%p8) target = $region8
    $region5: #{_phase_relu_complex_impl.1} parent=1 // loop_body
      %s12 = ssub.s32 %s7, 1
      %s13 = ssub.s32 %s7, 2
      %s14 = sadd.s32 %s7, 1
      %s15 = ssub.s32 %s7, %s14
      %p16 = scmp.eq.s32.totalorder %s15, 0
      %s18 = sadd.s32 %s17, 1
      %s19 = scalar_select %p16, %s17, %s18
      %p22 = pneg %p16
      %p23 = scmp.eq.s32.totalorder %s7, 1
      %p24 = por %p22, %p23
      %p25 = scmp.ne.s32.totalorder %s17, %s20
      %p26 = scmp.eq.s32.totalorder %s7, 0
      %p27 = por %p25, %p26
      %p28 = scmp.ne.s32.totalorder %s17, %s20
      %p29 = scmp.eq.s32.totalorder %s12, 1
      %p30 = por %p28, %p29
      %p31 = scmp.ne.s32.totalorder %s20, %s21
      %p32 = scmp.eq.s32.totalorder %s12, 0
      %p33 = por %p31, %p32
      %p34 = scmp.ne.s32.totalorder %s20, %s21
      %p35 = scmp.eq.s32.totalorder %s13, 1
      %p36 = por %p34, %p35
      %p38 = scmp.ne.s32.totalorder %s21, %s37
      %p39 = scmp.eq.s32.totalorder %s13, 0
      %p40 = por %p38, %p39
      %s41 = ssub.s32 %s7, %s14
      %p42 = scmp.eq.s32.totalorder %s41, 0
      %s44 = sadd.s32 %s43, 1
      %s45 = scalar_select %p42, %s43, %s44
      %p48 = pneg %p42
      %p49 = scmp.eq.s32.totalorder %s7, 1
      %p50 = por %p48, %p49
      %p51 = scmp.ne.s32.totalorder %s43, %s46
      %p52 = scmp.eq.s32.totalorder %s7, 0
      %p53 = por %p51, %p52
      %p54 = scmp.ne.s32.totalorder %s43, %s46
      %p55 = scmp.eq.s32.totalorder %s12, 1
      %p56 = por %p54, %p55
      %p57 = scmp.ne.s32.totalorder %s46, %s47
      %p58 = scmp.eq.s32.totalorder %s12, 0
      %p59 = por %p57, %p58
      %p60 = scmp.ne.s32.totalorder %s46, %s47
      %p61 = scmp.eq.s32.totalorder %s13, 1
      %p62 = por %p60, %p61
      %p64 = scmp.ne.s32.totalorder %s47, %s63
      %p65 = scmp.eq.s32.totalorder %s13, 0
      %p66 = por %p64, %p65
      %p67 = scmp.le.s32.totalorder 1, %s7
      %p68 = scmp.lt.s32.totalorder %s7, 3
      %p69 = pnand %p67, %p68
      %p70 = pneg %p69
      // Predicated region
      $region9: #{_phase_relu_complex_impl.1} parent=5 // pred_check
        _
      $region10: #{_phase_relu_complex_impl.1} parent=5 // pred_check_branch
        %72 = sbr.rel (%p69) target = $region12
      $region11: #{_phase_relu_complex_impl.1} parent=5 // pred_region
        %s73 = ssub.s32 %s7, 1
      $region12: #{_phase_relu_complex_impl.1} parent=5 // pred_fallthru
        _
      %p74 = scmp.lt.s32.totalorder %s7, 2
      // Predicated region
      $region13: #{_phase_relu_complex_impl.1} parent=5 // pred_check
        %p75 = pneg %p74
      $region14: #{_phase_relu_complex_impl.1} parent=5 // pred_check_branch
        %77 = sbr.rel (%p75) target = $region16
      $region15: #{_phase_relu_complex_impl.1} parent=5 // pred_region
        // Predicated region
        $region17: #{_phase_relu_complex_impl.1} parent=15 // pred_check
          %p78 = pneg %p27
        $region18: #{_phase_relu_complex_impl.1} parent=15 // pred_check_branch
          %80 = sbr.rel (%p78) target = $region20
        $region19: #{_phase_relu_complex_impl.1} parent=15 // pred_region
          %s81 = sand.u32 %s17, 1
          %s82 = sand.u32 %s17, 1
          %s83 = smul.addr %s82, 16
          %s84 = scalar_lea.vmem [#allocation2], %s83
          %s85 = smul.addr %s7, 8
          %s86 = scalar_lea.vmem %s0, %s85
          // Predicated region
          $region21: #{_phase_relu_complex_impl.1} parent=19 // pred_check
            _
          $region22: #{_phase_relu_complex_impl.1} parent=19 // pred_check_branch
            %88 = sbr.rel (0) target = $region24
          $region23: #{_phase_relu_complex_impl.1} parent=19 // pred_region
            // Predicated region
            $region25: #{_phase_relu_complex_impl.1} parent=23 // pred_check
              _
            $region26: #{_phase_relu_complex_impl.1} parent=23 // pred_check_branch
              %90 = sbr.rel (0) target = $region28
            $region27: #{_phase_relu_complex_impl.1} parent=23 // pred_region
              // Predicated region
              $region40: #{_phase_relu_complex_impl.1} parent=27 // pred_check
                _
              $region41: #{_phase_relu_complex_impl.1} parent=27 // pred_check_branch
                %107 = sbr.rel (0) target = $region43
              $region42: #{_phase_relu_complex_impl.1} parent=27 // pred_region
                loop: start=0, step=1, limit=1
                $region44: #{_phase_relu_complex_impl.1} parent=42 // loop_pre_header
                  _
                $region45: #{_phase_relu_complex_impl.1} parent=42 // loop_header
                  %s109 = sphi 0, %s113
                  %p110 = scmp.ge.s32.totalorder %s109, 1
                  %s114 = sphi %s86, %s86
                  %s115 = sphi %s84, %s84
                $region46: #{_phase_relu_complex_impl.1} parent=42 // loop_header_branch
                  %112 = sbr.rel (%p110) target = $region50
                $region47: #{_phase_relu_complex_impl.1} parent=42 // loop_body
                  %v116 = vld [vmem:[%s114] sm:$0xff]
                  %117 = vst [vmem:[%s115] sm:$0xff] %v116
                  %v118 = vld [vmem:[%s114 + $0x10] sm:$0xff]
                  %119 = vst [vmem:[%s115 + $0x8] sm:$0xff] %v118
                $region48: #{_phase_relu_complex_impl.1} parent=42 // loop_footer
                  %s113 = sadd.s32 1, %s109
                $region49: #{_phase_relu_complex_impl.1} parent=42 // loop_footer_branch
                  %108 = sbr.rel target = $region45
                $region50: #{_phase_relu_complex_impl.1} parent=42 // loop_exit
                  _
              $region43: #{_phase_relu_complex_impl.1} parent=27 // pred_fallthru
                _
              // Predicated region
              $region51: #{_phase_relu_complex_impl.1} parent=27 // pred_check
                _
              $region52: #{_phase_relu_complex_impl.1} parent=27 // pred_check_branch
                %121 = sbr.rel target = $region54
              $region53: #{_phase_relu_complex_impl.1} parent=27 // pred_region
                _
              $region54: #{_phase_relu_complex_impl.1} parent=27 // pred_fallthru
                _
            $region28: #{_phase_relu_complex_impl.1} parent=23 // pred_fallthru
              _
            // Predicated region
            $region29: #{_phase_relu_complex_impl.1} parent=23 // pred_check
              _
            $region30: #{_phase_relu_complex_impl.1} parent=23 // pred_check_branch
              %92 = sbr.rel target = $region32
            $region31: #{_phase_relu_complex_impl.1} parent=23 // pred_region
              loop: start=0, step=1, limit=1
              $region33: #{_phase_relu_complex_impl.1} parent=31 // loop_pre_header
                _
              $region34: #{_phase_relu_complex_impl.1} parent=31 // loop_header
                %s95 = sphi 0, %s99
                %p96 = scmp.ge.s32.totalorder %s95, 1
                %s100 = sphi %s86, %s86
                %s101 = sphi %s84, %s84
              $region35: #{_phase_relu_complex_impl.1} parent=31 // loop_header_branch
                %98 = sbr.rel (%p96) target = $region39
              $region36: #{_phase_relu_complex_impl.1} parent=31 // loop_body
                %v102 = vld [vmem:[%s100] sm:$0xff]
                %103 = vst [vmem:[%s101] sm:$0xff] %v102
                %v104 = vld [vmem:[%s100 + $0x10] sm:$0xff]
                %105 = vst [vmem:[%s101 + $0x8] sm:$0xff] %v104
              $region37: #{_phase_relu_complex_impl.1} parent=31 // loop_footer
                %s99 = sadd.s32 1, %s95
              $region38: #{_phase_relu_complex_impl.1} parent=31 // loop_footer_branch
                %94 = sbr.rel target = $region34
              $region39: #{_phase_relu_complex_impl.1} parent=31 // loop_exit
                _
            $region32: #{_phase_relu_complex_impl.1} parent=23 // pred_fallthru
              _
          $region24: #{_phase_relu_complex_impl.1} parent=19 // pred_fallthru
            _
          %122 = vnop
        $region20: #{_phase_relu_complex_impl.1} parent=15 // pred_fallthru
          _
      $region16: #{_phase_relu_complex_impl.1} parent=5 // pred_fallthru
        _
      %p123 = scmp.le.s32.totalorder 1, %s7
      %p124 = scmp.lt.s32.totalorder %s7, 3
      %p125 = pnand %p123, %p124
      %p126 = pneg %p125
      // Predicated region
      $region55: #{_phase_relu_complex_impl.1} parent=5 // pred_check
        _
      $region56: #{_phase_relu_complex_impl.1} parent=5 // pred_check_branch
        %128 = sbr.rel (%p125) target = $region58
      $region57: #{_phase_relu_complex_impl.1} parent=5 // pred_region
        %s129 = ssub.s32 %s7, 1
        %s130 = sand.u32 %s20, 1
        %s131 = sand.u32 %s20, 1
        %s132 = smul.addr %s131, 16
        %s133 = scalar_lea.vmem [#allocation2], %s132
        // Predicated region
        $region59: #{_phase_relu_complex_impl.1} parent=57 // pred_check
          %p134 = pneg %p33
        $region60: #{_phase_relu_complex_impl.1} parent=57 // pred_check_branch
          %136 = sbr.rel (%p134) target = $region62
        $region61: #{_phase_relu_complex_impl.1} parent=57 // pred_region
          _
        $region62: #{_phase_relu_complex_impl.1} parent=57 // pred_fallthru
          _
        %s137 = sand.u32 %s20, 1
        %s138 = sand.u32 %s20, 1
        %s139 = smul.addr %s138, 16
        %s140 = scalar_lea.vmem [#allocation2], %s139
        %p141 = pneg %p33
        %p142 = pneg %p30
        %p143 = pneg %p59
        %p144 = pneg %p56
        %s145 = sand.u32 %s46, 1
        %s146 = sand.u32 %s46, 1
        %s147 = smul.addr %s146, 16
        %s148 = scalar_lea.vmem [#allocation3], %s147
        %v149 = vld [vmem:[%s133] sm:$0xff]
        %s150 = scalar_lea.vmem %s133, 8 [#allocation2]
        %v151 = vld [vmem:[%s150] sm:$0xff]
        %v152 = vmul.f32 %v149, %v149
        %v153 = vmul.f32 %v151, %v151
        %v154 = vadd.f32 %v152, %v153
        %v155 = vrsqrt.pop %v154
        %v156 = vmul.f32 %v154, %v155
        %vm157 = vcmp.eq.f32.partialorder %v154, inf
        %v158 = vsel %vm157, %v154, %v156
        %vm159 = vcmp.eq.f32.partialorder %v154, 0.0
        %v160 = vand.u32 %v154, 2147483648
        %v161 = vsel %vm159, %v160, %v158
        %vm163 = vcmp.lt.s32.totalorder %v151, 0
        %v164 = vsel %vm163, %v161, %v149
        %165 = vst [vmem:[%s148] sm:$0xff] %v164
        %v166 = vmax.f32 %v151, 0.0
        %s167 = scalar_lea.vmem %s148, 8 [#allocation3]
        %168 = vst [vmem:[%s167] sm:$0xff] %v166
        %s169 = sand.u32 %s46, 1
        %s170 = sand.u32 %s46, 1
        %s171 = smul.addr %s170, 16
        %s172 = scalar_lea.vmem [#allocation3], %s171
        // Predicated region
        $region63: #{_phase_relu_complex_impl.1} parent=57 // pred_check
          %p173 = pneg %p56
        $region64: #{_phase_relu_complex_impl.1} parent=57 // pred_check_branch
          %175 = sbr.rel (%p173) target = $region66
        $region65: #{_phase_relu_complex_impl.1} parent=57 // pred_region
          %s176 = smul.addr %s12, 8
          %s177 = scalar_lea.vmem %s1, %s176
          // Predicated region
          $region67: #{_phase_relu_complex_impl.1} parent=65 // pred_check
            _
          $region68: #{_phase_relu_complex_impl.1} parent=65 // pred_check_branch
            %179 = sbr.rel (0) target = $region70
          $region69: #{_phase_relu_complex_impl.1} parent=65 // pred_region
            // Predicated region
            $region71: #{_phase_relu_complex_impl.1} parent=69 // pred_check
              _
            $region72: #{_phase_relu_complex_impl.1} parent=69 // pred_check_branch
              %181 = sbr.rel (0) target = $region74
            $region73: #{_phase_relu_complex_impl.1} parent=69 // pred_region
              // Predicated region
              $region86: #{_phase_relu_complex_impl.1} parent=73 // pred_check
                _
              $region87: #{_phase_relu_complex_impl.1} parent=73 // pred_check_branch
                %198 = sbr.rel (0) target = $region89
              $region88: #{_phase_relu_complex_impl.1} parent=73 // pred_region
                loop: start=0, step=1, limit=1
                $region90: #{_phase_relu_complex_impl.1} parent=88 // loop_pre_header
                  _
                $region91: #{_phase_relu_complex_impl.1} parent=88 // loop_header
                  %s200 = sphi 0, %s204
                  %p201 = scmp.ge.s32.totalorder %s200, 1
                  %s205 = sphi %s172, %s172
                  %s206 = sphi %s177, %s177
                $region92: #{_phase_relu_complex_impl.1} parent=88 // loop_header_branch
                  %203 = sbr.rel (%p201) target = $region96
                $region93: #{_phase_relu_complex_impl.1} parent=88 // loop_body
                  %v207 = vld [vmem:[%s205] sm:$0xff]
                  %208 = vst [vmem:[%s206] sm:$0xff] %v207
                  %v209 = vld [vmem:[%s205 + $0x8] sm:$0xff]
                  %210 = vst [vmem:[%s206 + $0x10] sm:$0xff] %v209
                $region94: #{_phase_relu_complex_impl.1} parent=88 // loop_footer
                  %s204 = sadd.s32 1, %s200
                $region95: #{_phase_relu_complex_impl.1} parent=88 // loop_footer_branch
                  %199 = sbr.rel target = $region91
                $region96: #{_phase_relu_complex_impl.1} parent=88 // loop_exit
                  _
              $region89: #{_phase_relu_complex_impl.1} parent=73 // pred_fallthru
                _
              // Predicated region
              $region97: #{_phase_relu_complex_impl.1} parent=73 // pred_check
                _
              $region98: #{_phase_relu_complex_impl.1} parent=73 // pred_check_branch
                %212 = sbr.rel target = $region100
              $region99: #{_phase_relu_complex_impl.1} parent=73 // pred_region
                _
              $region100: #{_phase_relu_complex_impl.1} parent=73 // pred_fallthru
                _
            $region74: #{_phase_relu_complex_impl.1} parent=69 // pred_fallthru
              _
            // Predicated region
            $region75: #{_phase_relu_complex_impl.1} parent=69 // pred_check
              _
            $region76: #{_phase_relu_complex_impl.1} parent=69 // pred_check_branch
              %183 = sbr.rel target = $region78
            $region77: #{_phase_relu_complex_impl.1} parent=69 // pred_region
              loop: start=0, step=1, limit=1
              $region79: #{_phase_relu_complex_impl.1} parent=77 // loop_pre_header
                _
              $region80: #{_phase_relu_complex_impl.1} parent=77 // loop_header
                %s186 = sphi 0, %s190
                %p187 = scmp.ge.s32.totalorder %s186, 1
                %s191 = sphi %s172, %s172
                %s192 = sphi %s177, %s177
              $region81: #{_phase_relu_complex_impl.1} parent=77 // loop_header_branch
                %189 = sbr.rel (%p187) target = $region85
              $region82: #{_phase_relu_complex_impl.1} parent=77 // loop_body
                %v193 = vld [vmem:[%s191] sm:$0xff]
                %194 = vst [vmem:[%s192] sm:$0xff] %v193
                %v195 = vld [vmem:[%s191 + $0x8] sm:$0xff]
                %196 = vst [vmem:[%s192 + $0x10] sm:$0xff] %v195
              $region83: #{_phase_relu_complex_impl.1} parent=77 // loop_footer
                %s190 = sadd.s32 1, %s186
              $region84: #{_phase_relu_complex_impl.1} parent=77 // loop_footer_branch
                %185 = sbr.rel target = $region80
              $region85: #{_phase_relu_complex_impl.1} parent=77 // loop_exit
                _
            $region78: #{_phase_relu_complex_impl.1} parent=69 // pred_fallthru
              _
          $region70: #{_phase_relu_complex_impl.1} parent=65 // pred_fallthru
            _
          %213 = vnop
        $region66: #{_phase_relu_complex_impl.1} parent=57 // pred_fallthru
          _
      $region58: #{_phase_relu_complex_impl.1} parent=5 // pred_fallthru
        _
      %p214 = scmp.le.s32.totalorder 2, %s7
      // Predicated region
      $region101: #{_phase_relu_complex_impl.1} parent=5 // pred_check
        %p215 = pneg %p214
      $region102: #{_phase_relu_complex_impl.1} parent=5 // pred_check_branch
        %217 = sbr.rel (%p215) target = $region104
      $region103: #{_phase_relu_complex_impl.1} parent=5 // pred_region
        %s218 = ssub.s32 %s7, 2
        // Predicated region
        $region105: #{_phase_relu_complex_impl.1} parent=103 // pred_check
          %p219 = pneg %p62
        $region106: #{_phase_relu_complex_impl.1} parent=103 // pred_check_branch
          %221 = sbr.rel (%p219) target = $region108
        $region107: #{_phase_relu_complex_impl.1} parent=103 // pred_region
          %s222 = sand.u32 %s47, 1
          %s223 = sand.u32 %s47, 1
          %s224 = smul.addr %s223, 16
          %s225 = scalar_lea.vmem [#allocation3], %s224
        $region108: #{_phase_relu_complex_impl.1} parent=103 // pred_fallthru
          _
      $region104: #{_phase_relu_complex_impl.1} parent=5 // pred_fallthru
        _
    $region6: #{_phase_relu_complex_impl.1} parent=1 // loop_footer
      %s11 = sadd.s32 1, %s7
    $region7: #{_phase_relu_complex_impl.1} parent=1 // loop_footer_branch
      %6 = sbr.rel target = $region3
    $region8: #{_phase_relu_complex_impl.1} parent=1 // loop_exit
      _

</llo_original>
